<compile_context>
chip_gen: v7x
topology: tpu7x:2x2x1
jax: 0.10.0
libtpu: 0.0.40
codegen_flags: <defaults>
</compile_context>

<pallas_src>
import functools

import jax
import jax.numpy as jnp
import numpy as np
from jax import lax
from jax.experimental import pallas as pl
from jax.experimental.pallas import tpu as pltpu


DOMAIN_NUM_DICT = {'MESSIDOR': 1744, 'IDRID': 516, 'DEEPDR': 2000,
                   'FGADR': 1842, 'APTOS': 3662, 'RLDR': 1593}
LABEL_NUM_DICT = {'MESSIDOR': [1016, 269, 347, 75, 35],
                  'IDRID': [175, 26, 163, 89, 60],
                  'DEEPDR': [917, 214, 402, 353, 113],
                  'FGADR': [100, 211, 595, 646, 286],
                  'APTOS': [1804, 369, 999, 192, 294],
                  'RLDR': [165, 336, 929, 98, 62]}

_WTAB_LANES = 128   # lane-padded width of the merged weight table


# ------------------------------ fused kernel ------------------------------- #

def _make_dah_kernel(num_heads, num_classes, temperature, base_temperature,
                     matmul_dtype):
    inv_t = 1.0 / float(temperature)
    tscale = float(temperature) / float(base_temperature)

    def kernel(params_ref, idx_ref, wtab_ref, ori_ref, new_ref, logits_ref,
               loss_ref, sup_ref, unsup_ref):
        b = ori_ref.shape[0]

        # ---------------- unsupervised SupCon (SimCLR, labels=None) --------- #
        a = ori_ref[...].astype(jnp.float32)             # [B, Dp]
        v = new_ref[...].astype(jnp.float32)             # [B, Dp]
        # == F.normalize(p=2, dim=-1, eps=1e-12)  (EUP rsqrt + VPU mul)
        a = a * lax.rsqrt(jnp.maximum(jnp.sum(a * a, -1, keepdims=True), 1e-24))
        v = v * lax.rsqrt(jnp.maximum(jnp.sum(v * v, -1, keepdims=True), 1e-24))

        # three [B,B] Gram blocks instead of one [2B,2B]; s_va = s_av^T reused.
        am = a.astype(matmul_dtype)
        vm = v.astype(matmul_dtype)
        dims = (((1,), (1,)), ((), ()))                  # contract feature dim
        s_aa = lax.dot_general(am, am, dims,
                               preferred_element_type=jnp.float32) * inv_t
        s_av = lax.dot_general(am, vm, dims,
                               preferred_element_type=jnp.float32) * inv_t
        s_vv = lax.dot_general(vm, vm, dims,
                               preferred_element_type=jnp.float32) * inv_t

        # Normalized-feature Gram diagonal == 1/T == the row max -> constant
        # shift; the shift cancels algebraically so no [2B,2B] max reduce.
        e_aa = jnp.exp(s_aa - inv_t)
        e_av = jnp.exp(s_av - inv_t)                     # diag = positive pair, kept
        e_vv = jnp.exp(s_vv - inv_t)

        # Self-contrast exclusion only touches the aa / vv diagonals.
        offdiag = (lax.broadcasted_iota(jnp.int32, (b, b), 0)
                   != lax.broadcasted_iota(jnp.int32, (b, b), 1))
        e_aa = jnp.where(offdiag, e_aa, 0.0)
        e_vv = jnp.where(offdiag, e_vv, 0.0)

        # Denominators for the virtual [2B,2B]:
        #   first-half anchors (rows of a):  row sums of e_aa + e_av
        #   second-half anchors (rows of v): column sums of e_av (= rows of
        #   e_va) + column sums of e_vv (symmetric, diag already zeroed)
        den_a = (jnp.sum(e_aa, -1, keepdims=True)
                 + jnp.sum(e_av, -1, keepdims=True))     # [B, 1]
        den_v = (jnp.sum(e_av, 0, keepdims=True)
                 + jnp.sum(e_vv, 0, keepdims=True))      # [1, B]

        # positive for anchor i is its other view: s[i, i+B] = a_i.v_i / T
        pos = jnp.sum(a * v, -1, keepdims=True) * inv_t  # [B, 1], used twice
        sum_log_prob_pos = (2.0 * jnp.sum(pos) - (2.0 * b) * inv_t
                            - jnp.sum(jnp.log(den_a)) - jnp.sum(jnp.log(den_v)))
        loss_unsup = -tscale * sum_log_prob_pos / (2.0 * b)

        # ------------- supervised CE, domain/class reweighted --------------- #
        lbl = idx_ref[:, 0:1]                            # [B, 1] int32
        dom = idx_ref[:, 1:2]                            # [B, 1] int32
        wlanes = wtab_ref.shape[1]
        lane = lax.broadcasted_iota(jnp.int32, (b, wlanes), 1)
        cls_oh = jnp.where(lane == lbl, 1.0, 0.0)        # [B, 128]
        dom_oh = jnp.where(lane == dom, 1.0, 0.0)        # [B, 128]
        # class / domain weights: 1/prob[label], 1/prob[domain] (in-kernel gather)
        cw = jnp.sum(cls_oh * wtab_ref[0:1, :], -1, keepdims=True)   # [B,1]
        dw = jnp.sum(dom_oh * wtab_ref[1:2, :], -1, keepdims=True)   # [B,1]

        onehot_c = cls_oh[:, :num_classes]               # [B, C]
        ce = jnp.zeros((b, 1), jnp.float32)
        for h in range(num_heads):
            lg = logits_ref[h].astype(jnp.float32)       # [B, C]
            m = jnp.max(lg, -1, keepdims=True)
            lse_h = m + jnp.log(jnp.sum(jnp.exp(lg - m), -1, keepdims=True))
            picked = jnp.sum(lg * onehot_c, -1, keepdims=True)
            ce = ce + (lse_h - picked)                   # sum of per-head CE

        loss_sup = jnp.mean(ce * cw * dw) / (jnp.mean(dw) * jnp.mean(cw))

        # -------------------------- final combine --------------------------- #
        alpha = params_ref[0]
        scaling = params_ref[1]
        loss_ref[0, 0] = (1.0 - alpha) * loss_sup + alpha * loss_unsup / scaling
        sup_ref[0, 0] = loss_sup
        unsup_ref[0, 0] = loss_unsup

    return kernel


def _pad_lanes(x, multiple=128):
    """Zero-pad the trailing dim to a lane multiple (norms/dots unchanged)."""
    pad = (-x.shape[-1]) % multiple
    if pad:
        x = jnp.pad(x, ((0, 0), (0, pad)))
    return x


@functools.partial(jax.jit, static_argnames=("temperature", "base_temperature",
                                              "feature_matmul_dtype"))
def dah_loss_forward(output, feats_ori, feats_new, labels, domains,
                     weight_table, alpha, scaling_factor,
                     *, temperature=0.07, base_temperature=0.07,
                     feature_matmul_dtype="float32"):
    output = tuple(output)
    num_heads = len(output)
    b, _ = feats_ori.shape
    num_classes = output[0].shape[1]
    matmul_dtype = (jnp.bfloat16 if feature_matmul_dtype == "bfloat16"
                    else jnp.float32)

    kernel = _make_dah_kernel(num_heads, num_classes, temperature,
                              base_temperature, matmul_dtype)

    # consolidated / lane-padded inputs (6 DMAs total)
    params = jnp.stack([jnp.asarray(alpha, jnp.float32),
                        jnp.asarray(scaling_factor, jnp.float32)])    # SMEM [2]
    idx = jnp.stack([labels.astype(jnp.int32),
                     domains.astype(jnp.int32)], axis=1)              # [B, 2]
    feats_ori = _pad_lanes(feats_ori.astype(jnp.float32))             # [B, Dp]
    feats_new = _pad_lanes(feats_new.astype(jnp.float32))             # [B, Dp]
    logits = jnp.stack([o.astype(jnp.float32) for o in output], axis=0)  # [H,B,C]
    dp = feats_ori.shape[1]

    vmem = pl.BlockSpec(memory_space=pltpu.MemorySpace.VMEM)
    smem = pl.BlockSpec(memory_space=pltpu.MemorySpace.SMEM)
    scalar_out = jax.ShapeDtypeStruct((1, 1), jnp.float32)

    cost = pl.CostEstimate(
        flops=int(3 * 2 * b * b * dp + 2 * num_heads * b * num_classes),
        transcendentals=int(3 * b * b + num_heads * b * num_classes + 8 * b),
        bytes_accessed=int(4 * (2 * b * dp + num_heads * b * num_classes
                                + 2 * _WTAB_LANES + 2 * b) + 8 + 12))

    loss, loss_sup, loss_unsup = pl.pallas_call(
        kernel,
        out_shape=(scalar_out, scalar_out, scalar_out),
        in_specs=[smem, vmem, vmem, vmem, vmem, vmem],
        out_specs=(smem, smem, smem),
        cost_estimate=cost,
    )(params, idx, weight_table, feats_ori, feats_new, logits)

    return loss[0, 0], loss_sup[0, 0], loss_unsup[0, 0]


# --------------------------------- module ----------------------------------- #

class DahLossPallas:
    def __init__(self, max_iteration, training_domains, beta=0.8,
                 scaling_factor=4, alpha=1, temperature=0.07):
        self.max_iteration = max_iteration
        self.training_domains = training_domains
        self.alpha = alpha
        self.beta = beta
        self.scaling_factor = scaling_factor
        self.temperature = temperature
        self.base_temperature = 0.07          # SupConLoss default inside DahLoss
        dp, lp = self._get_domain_label_prob()
        self.domain_prob, self.label_prob = self._multinomial_smoothing(dp, lp, beta)
        # merged, lane-padded reciprocal-prob table: row 0 = 1/label_prob,
        # row 1 = 1/domain_prob, zero-padded to 128 lanes.
        nc = int(self.label_prob.shape[0])
        nd = int(self.domain_prob.shape[0])
        assert nc <= _WTAB_LANES and nd <= _WTAB_LANES
        wtab = jnp.zeros((2, _WTAB_LANES), jnp.float32)
        wtab = wtab.at[0, :nc].set(1.0 / self.label_prob)
        wtab = wtab.at[1, :nd].set(1.0 / self.domain_prob)
        self.weight_table = wtab

    def _get_domain_label_prob(self):
        dnum = jnp.array([DOMAIN_NUM_DICT[d] for d in self.training_domains],
                         dtype=jnp.float32)
        domain_prob = dnum / jnp.sum(dnum)
        lnum = jnp.array([LABEL_NUM_DICT[d] for d in self.training_domains],
                         dtype=jnp.float32).sum(axis=0)
        label_prob = lnum / jnp.sum(lnum)
        return domain_prob, label_prob

    @staticmethod
    def _multinomial_smoothing(domain_prob, label_prob, beta=0.8):
        domain_prob = jnp.power(domain_prob, beta)
        label_prob = jnp.power(label_prob, beta)
        return domain_prob / jnp.sum(domain_prob), label_prob / jnp.sum(label_prob)

    def update_alpha(self, iteration):
        self.alpha = 1 - iteration / self.max_iteration
        return self.alpha

    def __call__(self, output, features, labels, domains):
        features_ori, features_new = features
        loss, loss_sup, loss_unsup = dah_loss_forward(
            tuple(output), features_ori, features_new, labels, domains,
            self.weight_table,
            jnp.asarray(self.alpha, jnp.float32),
            jnp.asarray(self.scaling_factor, jnp.float32),
            temperature=self.temperature,
            base_temperature=self.base_temperature)
        # device scalars (no blocking .item()/float() syncs)
        loss_dict = {'loss': loss, 'loss_sup': loss_sup, 'loss_unsup': loss_unsup}
        return loss, loss_dict


# ----------------------------- pure-JAX reference --------------------------- #

def _ref_dahloss(output, features, labels, domains, module: DahLossPallas):
    T = module.temperature
    bT = module.base_temperature
    dw = 1.0 / jnp.take(module.domain_prob, domains)
    cw = 1.0 / jnp.take(module.label_prob, labels)

    ori, new = features
    f = jnp.stack([ori, new], axis=1)
    f = f / jnp.maximum(jnp.linalg.norm(f, axis=2, keepdims=True), 1e-12)
    cf = jnp.concatenate([f[:, 0], f[:, 1]], axis=0)
    total = cf.shape[0]
    b = total // 2
    s = (cf @ cf.T) / T
    logits = s - jnp.max(s, axis=1, keepdims=True)
    lmask = 1.0 - jnp.eye(total, dtype=jnp.float32)
    exp_l = jnp.exp(logits) * lmask
    log_prob = logits - jnp.log(jnp.sum(exp_l, axis=1, keepdims=True))
    pos = jnp.roll(jnp.eye(total, dtype=jnp.float32), b, axis=1) * lmask
    mlp = jnp.sum(pos * log_prob, axis=1) / jnp.sum(pos, axis=1)
    loss_unsup = jnp.mean(-(T / bT) * mlp)

    loss_sup_ps = jnp.zeros(labels.shape[0], jnp.float32)
    for op in output:
        lse = jax.scipy.special.logsumexp(op, axis=1)
        picked = jnp.take_along_axis(op, labels[:, None], axis=1)[:, 0]
        loss_sup_ps = loss_sup_ps + (lse - picked)
    loss_sup = jnp.mean(loss_sup_ps * cw * dw) / (jnp.mean(dw) * jnp.mean(cw))
    loss = ((1 - module.alpha) * loss_sup
            + module.alpha * loss_unsup / module.scaling_factor)
    return loss, loss_sup, loss_unsup


# ------------------------------------ main ----------------------------------- #

if __name__ == "__main__":
    B, D, C, H = 8, 32, 5, 2
    training_domains = ['MESSIDOR', 'IDRID']

    key = jax.random.PRNGKey(0)
    k1, k2, k3, k4, k5, k6 = jax.random.split(key, 6)
    logits_a = jax.random.normal(k1, (B, C), dtype=jnp.float32)
    logits_b = jax.random.normal(k2, (B, C), dtype=jnp.float32)
    feats_ori = jax.random.normal(k3, (B, D), dtype=jnp.float32)
    feats_new = jax.random.normal(k4, (B, D), dtype=jnp.float32)
    labels = jax.random.randint(k5, (B,), 0, C, dtype=jnp.int32)
    domains = jax.random.randint(k6, (B,), 0, len(training_domains), dtype=jnp.int32)

    module = DahLossPallas(max_iteration=100, training_domains=training_domains)
    module.update_alpha(30)   # alpha = 0.7 -> exercises both loss branches + SMEM alpha

    loss, loss_dict = module((logits_a, logits_b), (feats_ori, feats_new),
                             labels, domains)
    jax.block_until_ready(loss)

    ref_loss, ref_sup, ref_unsup = _ref_dahloss(
        (logits_a, logits_b), (feats_ori, feats_new), labels, domains, module)
    np.testing.assert_allclose(float(loss), float(ref_loss), rtol=1e-5, atol=1e-5)
    np.testing.assert_allclose(float(loss_dict['loss_sup']), float(ref_sup),
                               rtol=1e-5, atol=1e-5)
    np.testing.assert_allclose(float(loss_dict['loss_unsup']), float(ref_unsup),
                               rtol=1e-5, atol=1e-5)

    print("KERNEL_OK")
</pallas_src>

<mosaic_0001>
module attributes {stable_mosaic.version = 11 : i64} {
  func.func @kernel(%arg0: memref<2xf32, #tpu.memory_space<smem>>, %arg1: memref<8x2xi32, #tpu.memory_space<vmem>>, %arg2: memref<2x128xf32, #tpu.memory_space<vmem>>, %arg3: memref<8x128xf32, #tpu.memory_space<vmem>>, %arg4: memref<8x128xf32, #tpu.memory_space<vmem>>, %arg5: memref<2x8x5xf32, #tpu.memory_space<vmem>>, %arg6: memref<1x1xf32, #tpu.memory_space<smem>>, %arg7: memref<1x1xf32, #tpu.memory_space<smem>>, %arg8: memref<1x1xf32, #tpu.memory_space<smem>>) attributes {dimension_semantics = [], scalar_prefetch = 0 : i64, scratch_operands = 0 : i64, tpu.core_type = #tpu.core_type<tc>} {
    %c0 = arith.constant 0 : index
    %c0_0 = arith.constant 0 : index
    %0 = vector.load %arg3[%c0, %c0_0] : memref<8x128xf32, #tpu.memory_space<vmem>>, vector<8x128xf32>
    %c0_1 = arith.constant 0 : index
    %c0_2 = arith.constant 0 : index
    %1 = vector.load %arg4[%c0_1, %c0_2] : memref<8x128xf32, #tpu.memory_space<vmem>>, vector<8x128xf32>
    %2 = arith.mulf %0, %0 : vector<8x128xf32>
    %cst = arith.constant dense<0.000000e+00> : vector<8xf32>
    %3 = vector.multi_reduction <add>, %2, %cst [1] : vector<8x128xf32> to vector<8xf32>
    %4 = vector.shape_cast %3 : vector<8xf32> to vector<8x1xf32>
    %cst_3 = arith.constant 1.000000e-24 : f32
    %5 = vector.broadcast %cst_3 : f32 to vector<8x1xf32>
    %6 = arith.maximumf %4, %5 : vector<8x1xf32>
    %7 = math.rsqrt %6 : vector<8x1xf32>
    %8 = vector.broadcast %7 : vector<8x1xf32> to vector<8x128xf32>
    %9 = arith.mulf %0, %8 : vector<8x128xf32>
    %10 = arith.mulf %1, %1 : vector<8x128xf32>
    %cst_4 = arith.constant dense<0.000000e+00> : vector<8xf32>
    %11 = vector.multi_reduction <add>, %10, %cst_4 [1] : vector<8x128xf32> to vector<8xf32>
    %12 = vector.shape_cast %11 : vector<8xf32> to vector<8x1xf32>
    %cst_5 = arith.constant 1.000000e-24 : f32
    %13 = vector.broadcast %cst_5 : f32 to vector<8x1xf32>
    %14 = arith.maximumf %12, %13 : vector<8x1xf32>
    %15 = math.rsqrt %14 : vector<8x1xf32>
    %16 = vector.broadcast %15 : vector<8x1xf32> to vector<8x128xf32>
    %17 = arith.mulf %1, %16 : vector<8x128xf32>
    %cst_6 = arith.constant dense<0.000000e+00> : vector<8x8xf32>
    %18 = tpu.matmul %9, %9, %cst_6 {dimension_numbers = #tpu.dot_dimension_numbers<[1], [1], [0], [0], [0, 0, 1, 0], [], []>} : vector<8x128xf32>, vector<8x128xf32>, vector<8x8xf32> -> vector<8x8xf32>
    %cst_7 = arith.constant 14.2857141 : f32
    %19 = vector.broadcast %cst_7 : f32 to vector<8x8xf32>
    %20 = arith.mulf %18, %19 : vector<8x8xf32>
    %cst_8 = arith.constant dense<0.000000e+00> : vector<8x8xf32>
    %21 = tpu.matmul %9, %17, %cst_8 {dimension_numbers = #tpu.dot_dimension_numbers<[1], [1], [0], [0], [0, 0, 1, 0], [], []>} : vector<8x128xf32>, vector<8x128xf32>, vector<8x8xf32> -> vector<8x8xf32>
    %cst_9 = arith.constant 14.2857141 : f32
    %22 = vector.broadcast %cst_9 : f32 to vector<8x8xf32>
    %23 = arith.mulf %21, %22 : vector<8x8xf32>
    %cst_10 = arith.constant dense<0.000000e+00> : vector<8x8xf32>
    %24 = tpu.matmul %17, %17, %cst_10 {dimension_numbers = #tpu.dot_dimension_numbers<[1], [1], [0], [0], [0, 0, 1, 0], [], []>} : vector<8x128xf32>, vector<8x128xf32>, vector<8x8xf32> -> vector<8x8xf32>
    %cst_11 = arith.constant 14.2857141 : f32
    %25 = vector.broadcast %cst_11 : f32 to vector<8x8xf32>
    %26 = arith.mulf %24, %25 : vector<8x8xf32>
    %cst_12 = arith.constant 14.2857141 : f32
    %27 = vector.broadcast %cst_12 : f32 to vector<8x8xf32>
    %28 = arith.subf %20, %27 : vector<8x8xf32>
    %29 = math.exp %28 : vector<8x8xf32>
    %cst_13 = arith.constant 14.2857141 : f32
    %30 = vector.broadcast %cst_13 : f32 to vector<8x8xf32>
    %31 = arith.subf %23, %30 : vector<8x8xf32>
    %32 = math.exp %31 : vector<8x8xf32>
    %cst_14 = arith.constant 14.2857141 : f32
    %33 = vector.broadcast %cst_14 : f32 to vector<8x8xf32>
    %34 = arith.subf %26, %33 : vector<8x8xf32>
    %35 = math.exp %34 : vector<8x8xf32>
    %36 = tpu.iota {dimensions = array<i32: 0>} : vector<8x8xi32>
    %37 = tpu.iota {dimensions = array<i32: 1>} : vector<8x8xi32>
    %38 = arith.cmpi ne, %36, %37 : vector<8x8xi32>
    %cst_15 = arith.constant 0.000000e+00 : f32
    %39 = vector.broadcast %cst_15 : f32 to vector<8x8xf32>
    %40 = arith.select %38, %29, %39 : vector<8x8xi1>, vector<8x8xf32>
    %cst_16 = arith.constant 0.000000e+00 : f32
    %41 = vector.broadcast %cst_16 : f32 to vector<8x8xf32>
    %42 = arith.select %38, %35, %41 : vector<8x8xi1>, vector<8x8xf32>
    %cst_17 = arith.constant dense<0.000000e+00> : vector<8xf32>
    %43 = vector.multi_reduction <add>, %40, %cst_17 [1] : vector<8x8xf32> to vector<8xf32>
    %44 = vector.shape_cast %43 : vector<8xf32> to vector<8x1xf32>
    %cst_18 = arith.constant dense<0.000000e+00> : vector<8xf32>
    %45 = vector.multi_reduction <add>, %32, %cst_18 [1] : vector<8x8xf32> to vector<8xf32>
    %46 = vector.shape_cast %45 : vector<8xf32> to vector<8x1xf32>
    %47 = arith.addf %44, %46 : vector<8x1xf32>
    %cst_19 = arith.constant dense<0.000000e+00> : vector<8xf32>
    %48 = vector.multi_reduction <add>, %32, %cst_19 [0] : vector<8x8xf32> to vector<8xf32>
    %49 = vector.shape_cast %48 : vector<8xf32> to vector<1x8xf32>
    %cst_20 = arith.constant dense<0.000000e+00> : vector<8xf32>
    %50 = vector.multi_reduction <add>, %42, %cst_20 [0] : vector<8x8xf32> to vector<8xf32>
    %51 = vector.shape_cast %50 : vector<8xf32> to vector<1x8xf32>
    %52 = arith.addf %49, %51 : vector<1x8xf32>
    %53 = arith.mulf %9, %17 : vector<8x128xf32>
    %cst_21 = arith.constant dense<0.000000e+00> : vector<8xf32>
    %54 = vector.multi_reduction <add>, %53, %cst_21 [1] : vector<8x128xf32> to vector<8xf32>
    %55 = vector.shape_cast %54 : vector<8xf32> to vector<8x1xf32>
    %cst_22 = arith.constant 14.2857141 : f32
    %56 = vector.broadcast %cst_22 : f32 to vector<8x1xf32>
    %57 = arith.mulf %55, %56 : vector<8x1xf32>
    %58 = vector.shape_cast %57 : vector<8x1xf32> to vector<1x8x1xf32>
    %cst_23 = arith.constant dense<0.000000e+00> : vector<1xf32>
    %59 = vector.multi_reduction <add>, %58, %cst_23 [1, 2] : vector<1x8x1xf32> to vector<1xf32>
    %60 = vector.shape_cast %59 : vector<1xf32> to vector<1x1x1xf32>
    %61 = vector.extract %60[0, 0, 0] : f32 from vector<1x1x1xf32>
    %cst_24 = arith.constant 2.000000e+00 : f32
    %62 = arith.mulf %cst_24, %61 : f32
    %cst_25 = arith.constant 228.571426 : f32
    %63 = arith.subf %62, %cst_25 : f32
    %64 = math.log %47 : vector<8x1xf32>
    %65 = vector.shape_cast %64 : vector<8x1xf32> to vector<1x8x1xf32>
    %cst_26 = arith.constant dense<0.000000e+00> : vector<1xf32>
    %66 = vector.multi_reduction <add>, %65, %cst_26 [1, 2] : vector<1x8x1xf32> to vector<1xf32>
    %67 = vector.shape_cast %66 : vector<1xf32> to vector<1x1x1xf32>
    %68 = vector.extract %67[0, 0, 0] : f32 from vector<1x1x1xf32>
    %69 = arith.subf %63, %68 : f32
    %70 = math.log %52 : vector<1x8xf32>
    %71 = vector.shape_cast %70 : vector<1x8xf32> to vector<1x1x8xf32>
    %cst_27 = arith.constant dense<0.000000e+00> : vector<1xf32>
    %72 = vector.multi_reduction <add>, %71, %cst_27 [1, 2] : vector<1x1x8xf32> to vector<1xf32>
    %73 = vector.shape_cast %72 : vector<1xf32> to vector<1x1x1xf32>
    %74 = vector.extract %73[0, 0, 0] : f32 from vector<1x1x1xf32>
    %75 = arith.subf %69, %74 : f32
    %cst_28 = arith.constant -1.000000e+00 : f32
    %76 = arith.mulf %cst_28, %75 : f32
    %cst_29 = arith.constant 1.600000e+01 : f32
    %77 = arith.divf %76, %cst_29 : f32
    %c0_30 = arith.constant 0 : index
    %c0_31 = arith.constant 0 : index
    %78 = vector.load %arg1[%c0_30, %c0_31] : memref<8x2xi32, #tpu.memory_space<vmem>>, vector<8x1xi32>
    %c0_32 = arith.constant 0 : index
    %c1 = arith.constant 1 : index
    %79 = vector.load %arg1[%c0_32, %c1] : memref<8x2xi32, #tpu.memory_space<vmem>>, vector<8x1xi32>
    %80 = tpu.iota {dimensions = array<i32: 1>} : vector<8x128xi32>
    %81 = vector.broadcast %78 : vector<8x1xi32> to vector<8x128xi32>
    %82 = arith.cmpi eq, %80, %81 : vector<8x128xi32>
    %cst_33 = arith.constant 1.000000e+00 : f32
    %cst_34 = arith.constant 0.000000e+00 : f32
    %83 = vector.broadcast %cst_33 : f32 to vector<8x128xf32>
    %84 = vector.broadcast %cst_34 : f32 to vector<8x128xf32>
    %85 = arith.select %82, %83, %84 : vector<8x128xi1>, vector<8x128xf32>
    %86 = vector.broadcast %79 : vector<8x1xi32> to vector<8x128xi32>
    %87 = arith.cmpi eq, %80, %86 : vector<8x128xi32>
    %cst_35 = arith.constant 1.000000e+00 : f32
    %cst_36 = arith.constant 0.000000e+00 : f32
    %88 = vector.broadcast %cst_35 : f32 to vector<8x128xf32>
    %89 = vector.broadcast %cst_36 : f32 to vector<8x128xf32>
    %90 = arith.select %87, %88, %89 : vector<8x128xi1>, vector<8x128xf32>
    %c0_37 = arith.constant 0 : index
    %c0_38 = arith.constant 0 : index
    %91 = vector.load %arg2[%c0_37, %c0_38] : memref<2x128xf32, #tpu.memory_space<vmem>>, vector<1x128xf32>
    %92 = vector.broadcast %91 : vector<1x128xf32> to vector<8x128xf32>
    %93 = arith.mulf %85, %92 : vector<8x128xf32>
    %cst_39 = arith.constant dense<0.000000e+00> : vector<8xf32>
    %94 = vector.multi_reduction <add>, %93, %cst_39 [1] : vector<8x128xf32> to vector<8xf32>
    %95 = vector.shape_cast %94 : vector<8xf32> to vector<8x1xf32>
    %c1_40 = arith.constant 1 : index
    %c0_41 = arith.constant 0 : index
    %96 = vector.load %arg2[%c1_40, %c0_41] : memref<2x128xf32, #tpu.memory_space<vmem>>, vector<1x128xf32>
    %97 = vector.broadcast %96 : vector<1x128xf32> to vector<8x128xf32>
    %98 = arith.mulf %90, %97 : vector<8x128xf32>
    %cst_42 = arith.constant dense<0.000000e+00> : vector<8xf32>
    %99 = vector.multi_reduction <add>, %98, %cst_42 [1] : vector<8x128xf32> to vector<8xf32>
    %100 = vector.shape_cast %99 : vector<8xf32> to vector<8x1xf32>
    %101 = vector.extract_strided_slice %85 {offsets = [0, 0], sizes = [8, 5], strides = [1, 1]} : vector<8x128xf32> to vector<8x5xf32>
    %cst_43 = arith.constant 0.000000e+00 : f32
    %102 = vector.broadcast %cst_43 : f32 to vector<8x1xf32>
    %c0_44 = arith.constant 0 : index
    %c0_45 = arith.constant 0 : index
    %c0_46 = arith.constant 0 : index
    %103 = vector.load %arg5[%c0_44, %c0_45, %c0_46] : memref<2x8x5xf32, #tpu.memory_space<vmem>>, vector<1x8x5xf32>
    %104 = vector.shape_cast %103 : vector<1x8x5xf32> to vector<8x5xf32>
    %cst_47 = arith.constant dense<0xFF800000> : vector<8xf32>
    %105 = vector.multi_reduction <maximumf>, %104, %cst_47 [1] : vector<8x5xf32> to vector<8xf32>
    %106 = vector.shape_cast %105 : vector<8xf32> to vector<8x1xf32>
    %107 = vector.broadcast %106 : vector<8x1xf32> to vector<8x5xf32>
    %108 = arith.subf %104, %107 : vector<8x5xf32>
    %109 = math.exp %108 : vector<8x5xf32>
    %cst_48 = arith.constant dense<0.000000e+00> : vector<8xf32>
    %110 = vector.multi_reduction <add>, %109, %cst_48 [1] : vector<8x5xf32> to vector<8xf32>
    %111 = vector.shape_cast %110 : vector<8xf32> to vector<8x1xf32>
    %112 = math.log %111 : vector<8x1xf32>
    %113 = arith.addf %106, %112 : vector<8x1xf32>
    %114 = arith.mulf %104, %101 : vector<8x5xf32>
    %cst_49 = arith.constant dense<0.000000e+00> : vector<8xf32>
    %115 = vector.multi_reduction <add>, %114, %cst_49 [1] : vector<8x5xf32> to vector<8xf32>
    %116 = vector.shape_cast %115 : vector<8xf32> to vector<8x1xf32>
    %117 = arith.subf %113, %116 : vector<8x1xf32>
    %118 = arith.addf %102, %117 : vector<8x1xf32>
    %c1_50 = arith.constant 1 : index
    %c0_51 = arith.constant 0 : index
    %c0_52 = arith.constant 0 : index
    %119 = vector.load %arg5[%c1_50, %c0_51, %c0_52] : memref<2x8x5xf32, #tpu.memory_space<vmem>>, vector<1x8x5xf32>
    %120 = vector.shape_cast %119 : vector<1x8x5xf32> to vector<8x5xf32>
    %cst_53 = arith.constant dense<0xFF800000> : vector<8xf32>
    %121 = vector.multi_reduction <maximumf>, %120, %cst_53 [1] : vector<8x5xf32> to vector<8xf32>
    %122 = vector.shape_cast %121 : vector<8xf32> to vector<8x1xf32>
    %123 = vector.broadcast %122 : vector<8x1xf32> to vector<8x5xf32>
    %124 = arith.subf %120, %123 : vector<8x5xf32>
    %125 = math.exp %124 : vector<8x5xf32>
    %cst_54 = arith.constant dense<0.000000e+00> : vector<8xf32>
    %126 = vector.multi_reduction <add>, %125, %cst_54 [1] : vector<8x5xf32> to vector<8xf32>
    %127 = vector.shape_cast %126 : vector<8xf32> to vector<8x1xf32>
    %128 = math.log %127 : vector<8x1xf32>
    %129 = arith.addf %122, %128 : vector<8x1xf32>
    %130 = arith.mulf %120, %101 : vector<8x5xf32>
    %cst_55 = arith.constant dense<0.000000e+00> : vector<8xf32>
    %131 = vector.multi_reduction <add>, %130, %cst_55 [1] : vector<8x5xf32> to vector<8xf32>
    %132 = vector.shape_cast %131 : vector<8xf32> to vector<8x1xf32>
    %133 = arith.subf %129, %132 : vector<8x1xf32>
    %134 = arith.addf %118, %133 : vector<8x1xf32>
    %135 = arith.mulf %134, %95 : vector<8x1xf32>
    %136 = arith.mulf %135, %100 : vector<8x1xf32>
    %137 = vector.shape_cast %136 : vector<8x1xf32> to vector<1x8x1xf32>
    %cst_56 = arith.constant dense<0.000000e+00> : vector<1xf32>
    %138 = vector.multi_reduction <add>, %137, %cst_56 [1, 2] : vector<1x8x1xf32> to vector<1xf32>
    %139 = vector.shape_cast %138 : vector<1xf32> to vector<1x1x1xf32>
    %140 = vector.extract %139[0, 0, 0] : f32 from vector<1x1x1xf32>
    %cst_57 = arith.constant 8.000000e+00 : f32
    %141 = arith.divf %140, %cst_57 : f32
    %142 = vector.shape_cast %100 : vector<8x1xf32> to vector<1x8x1xf32>
    %cst_58 = arith.constant dense<0.000000e+00> : vector<1xf32>
    %143 = vector.multi_reduction <add>, %142, %cst_58 [1, 2] : vector<1x8x1xf32> to vector<1xf32>
    %144 = vector.shape_cast %143 : vector<1xf32> to vector<1x1x1xf32>
    %145 = vector.extract %144[0, 0, 0] : f32 from vector<1x1x1xf32>
    %cst_59 = arith.constant 8.000000e+00 : f32
    %146 = arith.divf %145, %cst_59 : f32
    %147 = vector.shape_cast %95 : vector<8x1xf32> to vector<1x8x1xf32>
    %cst_60 = arith.constant dense<0.000000e+00> : vector<1xf32>
    %148 = vector.multi_reduction <add>, %147, %cst_60 [1, 2] : vector<1x8x1xf32> to vector<1xf32>
    %149 = vector.shape_cast %148 : vector<1xf32> to vector<1x1x1xf32>
    %150 = vector.extract %149[0, 0, 0] : f32 from vector<1x1x1xf32>
    %cst_61 = arith.constant 8.000000e+00 : f32
    %151 = arith.divf %150, %cst_61 : f32
    %152 = arith.mulf %146, %151 : f32
    %153 = arith.divf %141, %152 : f32
    %c0_62 = arith.constant 0 : index
    %154 = memref.load %arg0[%c0_62] : memref<2xf32, #tpu.memory_space<smem>>
    %c1_63 = arith.constant 1 : index
    %155 = memref.load %arg0[%c1_63] : memref<2xf32, #tpu.memory_space<smem>>
    %cst_64 = arith.constant 1.000000e+00 : f32
    %156 = arith.subf %cst_64, %154 : f32
    %157 = arith.mulf %156, %153 : f32
    %158 = arith.mulf %154, %77 : f32
    %159 = arith.divf %158, %155 : f32
    %160 = arith.addf %157, %159 : f32
    %c0_65 = arith.constant 0 : index
    %c0_66 = arith.constant 0 : index
    %161 = memref.load %arg6[%c0_65, %c0_66] : memref<1x1xf32, #tpu.memory_space<smem>>
    memref.store %160, %arg6[%c0_65, %c0_66] : memref<1x1xf32, #tpu.memory_space<smem>>
    %c0_67 = arith.constant 0 : index
    %c0_68 = arith.constant 0 : index
    %162 = memref.load %arg7[%c0_67, %c0_68] : memref<1x1xf32, #tpu.memory_space<smem>>
    memref.store %153, %arg7[%c0_67, %c0_68] : memref<1x1xf32, #tpu.memory_space<smem>>
    %c0_69 = arith.constant 0 : index
    %c0_70 = arith.constant 0 : index
    %163 = memref.load %arg8[%c0_69, %c0_70] : memref<1x1xf32, #tpu.memory_space<smem>>
    memref.store %77, %arg8[%c0_69, %c0_70] : memref<1x1xf32, #tpu.memory_space<smem>>
    return
  }
}

</mosaic_0001>

<llo_original>
// kernel: dah_loss_forward.1
$region0: #{dah_loss_forward.1}
  #allocation0 [shape = 'u32[]', space=smem, size = 0x4, offset = 0x4, fixed_abs, tag = 'smem constant byte address 0x4 - core index']
  #allocation1 [shape = 'u32[144,128]{1,0:T(1,128)}', space=vmem, size = 0x12000, scoped, tag = 'internal scratch']
  %s0 = inlined_call_operand.vmem [shape: f32[2], index: 0, kind: input, shape index: {}]
  %s1 = inlined_call_operand.vmem [shape: s32[8,2], index: 1, kind: input, shape index: {}]
  %s2 = inlined_call_operand.vmem [shape: f32[2,128], index: 2, kind: input, shape index: {}]
  %s3 = inlined_call_operand.vmem [shape: f32[8,128], index: 3, kind: input, shape index: {}]
  %s4 = inlined_call_operand.vmem [shape: f32[8,128], index: 4, kind: input, shape index: {}]
  %s5 = inlined_call_operand.vmem [shape: f32[2,8,5], index: 5, kind: input, shape index: {}]
  %s6 = inlined_call_operand.hbm [shape: f32[1,1], index: 6, kind: output, shape index: {0}]
  %s7 = inlined_call_operand.hbm [shape: f32[1,1], index: 7, kind: output, shape index: {1}]
  %s8 = inlined_call_operand.hbm [shape: f32[1,1], index: 8, kind: output, shape index: {2}]
  %9 = xla_tuple %s6, %s7, %s8
  %s10 = sld [smem:[#allocation0]]
  $region54: #{dah_loss_forward.1} parent=0
    _
  %s12 = ssub.s32 1, %s10
  %s13 = scalar_select 0, %s12, %s10
  $region1: #{dah_loss_forward.1} parent=0
    #allocation2 [shape = 'u8[512]{0}', space=smem, size = 0x200, scoped, tag = 'input window, operand 0, single buffered']
    #allocation3 [shape = 's32[1]{0}', space=sflag, size = 0x4, scoped, tag = 'scoped memory for dah_loss_forward.1']
    #allocation4 [shape = 's32[1]{0}', space=sflag, size = 0x4, scoped, tag = 'scoped memory for dah_loss_forward.1']
    #allocation5 [shape = 'u8[512]{0}', space=smem, size = 0x200, scoped, tag = 'output window, operand 0, single buffered']
    #allocation6 [shape = 'u8[512]{0}', space=smem, size = 0x200, scoped, tag = 'output window, operand 1, single buffered']
    #allocation7 [shape = 's32[1]{0}', space=sflag, size = 0x4, scoped, tag = 'scoped memory for dah_loss_forward.1']
    #allocation8 [shape = 'u8[512]{0}', space=smem, size = 0x200, scoped, tag = 'output window, operand 2, single buffered']
    %14 = vsyncpa [#allocation4], 0
    %15 = vsyncpa [#allocation3], 0
    %16 = vsyncpa [#allocation7], 0
    // Predicated region
    $region2: #{dah_loss_forward.1} parent=1 // pred_check
      _
    $region3: #{dah_loss_forward.1} parent=1 // pred_check_branch
      %18 = sbr.rel (0) target = $region5
    $region4: #{dah_loss_forward.1} parent=1 // pred_region
      %s20 = ssub.s32 16, 16
      %21 = vsyncadd [#allocation4], %s20
      %s23 = sshll.u32 %s0, 4
      %s24 = int_to_ptr.vmem [resolvable:$true] %s23
      %26 = dma.vmem_to_smem %s24, 16, [#allocation2], [#allocation4]
    $region5: #{dah_loss_forward.1} parent=1 // pred_fallthru
      _
    // Predicated region
    $region6: #{dah_loss_forward.1} parent=1 // pred_check
      _
    $region7: #{dah_loss_forward.1} parent=1 // pred_check_branch
      %28 = sbr.rel (0) target = $region9
    $region8: #{dah_loss_forward.1} parent=1 // pred_region
      _
    $region9: #{dah_loss_forward.1} parent=1 // pred_fallthru
      _
    // Predicated region
    $region10: #{dah_loss_forward.1} parent=1 // pred_check
      _
    $region11: #{dah_loss_forward.1} parent=1 // pred_check_branch
      %30 = sbr.rel (0) target = $region13
    $region12: #{dah_loss_forward.1} parent=1 // pred_region
      _
    $region13: #{dah_loss_forward.1} parent=1 // pred_fallthru
      _
    // Predicated region
    $region14: #{dah_loss_forward.1} parent=1 // pred_check
      _
    $region15: #{dah_loss_forward.1} parent=1 // pred_check_branch
      %32 = sbr.rel (0) target = $region17
    $region16: #{dah_loss_forward.1} parent=1 // pred_region
      _
    $region17: #{dah_loss_forward.1} parent=1 // pred_fallthru
      _
    // Predicated region
    $region18: #{dah_loss_forward.1} parent=1 // pred_check
      _
    $region19: #{dah_loss_forward.1} parent=1 // pred_check_branch
      %34 = sbr.rel (0) target = $region21
    $region20: #{dah_loss_forward.1} parent=1 // pred_region
      _
    $region21: #{dah_loss_forward.1} parent=1 // pred_fallthru
      _
    // Predicated region
    $region22: #{dah_loss_forward.1} parent=1 // pred_check
      _
    $region23: #{dah_loss_forward.1} parent=1 // pred_check_branch
      %36 = sbr.rel (0) target = $region25
    $region24: #{dah_loss_forward.1} parent=1 // pred_region
      _
    $region25: #{dah_loss_forward.1} parent=1 // pred_fallthru
      _
    // Predicated region
    $region26: #{dah_loss_forward.1} parent=1 // pred_check
      _
    $region27: #{dah_loss_forward.1} parent=1 // pred_check_branch
      %38 = sbr.rel (0) target = $region29
    $region28: #{dah_loss_forward.1} parent=1 // pred_region
      %39 = dma.done [#allocation4], 16
    $region29: #{dah_loss_forward.1} parent=1 // pred_fallthru
      _
    %40 = sfence
    %v41 = vld [vmem:[%s3] sm:$0xff]
    %v42 = vld [vmem:[%s4] sm:$0xff]
    %v43 = vmul.f32 %v41, %v41
    %44 = vadd.xlane.f32.xlu0 %v43
    %v45 = vpop.xlane.xlu0 %44
    %v46 = vmax.f32 %v45, 1e-24
    %v47 = vrsqrt.pop %v46
    %v48 = vmul.f32 %v41, %v47
    %v49 = vmul.f32 %v42, %v42
    %50 = vadd.xlane.f32.xlu0 %v49
    %v51 = vpop.xlane.xlu0 %50
    %v52 = vmax.f32 %v51, 1e-24
    %v53 = vrsqrt.pop %v52
    %v54 = vmul.f32 %v42, %v53
    %55 = vmatprep.subr.mxu0 0.0
    %56 = vmatpush1.xpose.msra.mxu0 %v48
    %57 = vmatprep.subr.mxu0 0.0
    %58 = vmatpush1.xpose.msra.mxu0 0.0
    %59 = vmatprep.subr.mxu0 0.0
    %60 = vmatpush1.xpose.msra.mxu0 0.0
    %61 = vmatprep.subr.mxu0 0.0
    %62 = vmatpush1.xpose.msra.mxu0 0.0
    %63 = vmatprep.subr.mxu0 0.0
    %64 = vmatpush1.xpose.msra.mxu0 0.0
    %65 = vmatprep.subr.mxu0 0.0
    %66 = vmatpush1.xpose.msra.mxu0 0.0
    %67 = vmatprep.subr.mxu0 0.0
    %68 = vmatpush1.xpose.msra.mxu0 0.0
    %69 = vmatprep.subr.mxu0 0.0
    %70 = vmatpush1.xpose.msra.mxu0 0.0
    %71 = vmatprep.subr.mxu0 0.0
    %72 = vmatpush1.xpose.msra.mxu0 0.0
    %73 = vmatprep.subr.mxu0 0.0
    %74 = vmatpush1.xpose.msra.mxu0 0.0
    %75 = vmatprep.subr.mxu0 0.0
    %76 = vmatpush1.xpose.msra.mxu0 0.0
    %77 = vmatprep.subr.mxu0 0.0
    %78 = vmatpush1.xpose.msra.mxu0 0.0
    %79 = vmatprep.subr.mxu0 0.0
    %80 = vmatpush1.xpose.msra.mxu0 0.0
    %81 = vmatprep.subr.mxu0 0.0
    %82 = vmatpush1.xpose.msra.mxu0 0.0
    %83 = vmatprep.subr.mxu0 0.0
    %84 = vmatpush1.xpose.msra.mxu0 0.0
    %85 = vmatprep.subr.mxu0 0.0
    %86 = vmatpush1.xpose.msra.mxu0 0.0
    %87 = vmatprep.subr.mxu0 0.0
    %88 = vmatpush1.xpose.msra.mxu0 0.0
    %89 = vmatprep.subr.mxu0 0.0
    %90 = vmatpush1.xpose.msra.mxu0 0.0
    %91 = vmatprep.subr.mxu0 0.0
    %92 = vmatpush1.xpose.msra.mxu0 0.0
    %93 = vmatprep.subr.mxu0 0.0
    %94 = vmatpush1.xpose.msra.mxu0 0.0
    %95 = vmatprep.subr.mxu0 0.0
    %96 = vmatpush1.xpose.msra.mxu0 0.0
    %97 = vmatprep.subr.mxu0 0.0
    %98 = vmatpush1.xpose.msra.mxu0 0.0
    %99 = vmatprep.subr.mxu0 0.0
    %100 = vmatpush1.xpose.msra.mxu0 0.0
    %101 = vmatprep.subr.mxu0 0.0
    %102 = vmatpush1.xpose.msra.mxu0 0.0
    %103 = vmatprep.subr.mxu0 0.0
    %104 = vmatpush1.xpose.msra.mxu0 0.0
    %105 = vmatprep.subr.mxu0 0.0
    %106 = vmatpush1.xpose.msra.mxu0 0.0
    %107 = vmatprep.subr.mxu0 0.0
    %108 = vmatpush1.xpose.msra.mxu0 0.0
    %109 = vmatprep.subr.mxu0 0.0
    %110 = vmatpush1.xpose.msra.mxu0 0.0
    %111 = vmatprep.subr.mxu0 0.0
    %112 = vmatpush1.xpose.msra.mxu0 0.0
    %113 = vmatprep.subr.mxu0 0.0
    %114 = vmatpush1.xpose.msra.mxu0 0.0
    %115 = vmatprep.subr.mxu0 0.0
    %116 = vmatpush1.xpose.msra.mxu0 0.0
    %117 = vmatprep.subr.mxu0 0.0
    %118 = vmatpush1.xpose.msra.mxu0 0.0
    %119 = vmatprep.mubr.f32.mxu0 0.0
    %120 = vmatmul.mubr.f32.gmra.mrb[0].mxu0 %v48
    %v121 = vpop.f32.mrb[0].mxu0
    %v122 = vadd.f32 0.0, %v121
    %v123 = vpop.f32.mrb[0].mxu0
    %124 = vdwg.mxu0
    %v125 = vmul.f32 %v122, 14.285714
    %126 = vmatprep.subr.mxu0 0.0
    %127 = vmatpush1.xpose.msra.mxu0 %v54
    %128 = vmatprep.subr.mxu0 0.0
    %129 = vmatpush1.xpose.msra.mxu0 0.0
    %130 = vmatprep.subr.mxu0 0.0
    %131 = vmatpush1.xpose.msra.mxu0 0.0
    %132 = vmatprep.subr.mxu0 0.0
    %133 = vmatpush1.xpose.msra.mxu0 0.0
    %134 = vmatprep.subr.mxu0 0.0
    %135 = vmatpush1.xpose.msra.mxu0 0.0
    %136 = vmatprep.subr.mxu0 0.0
    %137 = vmatpush1.xpose.msra.mxu0 0.0
    %138 = vmatprep.subr.mxu0 0.0
    %139 = vmatpush1.xpose.msra.mxu0 0.0
    %140 = vmatprep.subr.mxu0 0.0
    %141 = vmatpush1.xpose.msra.mxu0 0.0
    %142 = vmatprep.subr.mxu0 0.0
    %143 = vmatpush1.xpose.msra.mxu0 0.0
    %144 = vmatprep.subr.mxu0 0.0
    %145 = vmatpush1.xpose.msra.mxu0 0.0
    %146 = vmatprep.subr.mxu0 0.0
    %147 = vmatpush1.xpose.msra.mxu0 0.0
    %148 = vmatprep.subr.mxu0 0.0
    %149 = vmatpush1.xpose.msra.mxu0 0.0
    %150 = vmatprep.subr.mxu0 0.0
    %151 = vmatpush1.xpose.msra.mxu0 0.0
    %152 = vmatprep.subr.mxu0 0.0
    %153 = vmatpush1.xpose.msra.mxu0 0.0
    %154 = vmatprep.subr.mxu0 0.0
    %155 = vmatpush1.xpose.msra.mxu0 0.0
    %156 = vmatprep.subr.mxu0 0.0
    %157 = vmatpush1.xpose.msra.mxu0 0.0
    %158 = vmatprep.subr.mxu0 0.0
    %159 = vmatpush1.xpose.msra.mxu0 0.0
    %160 = vmatprep.subr.mxu0 0.0
    %161 = vmatpush1.xpose.msra.mxu0 0.0
    %162 = vmatprep.subr.mxu0 0.0
    %163 = vmatpush1.xpose.msra.mxu0 0.0
    %164 = vmatprep.subr.mxu0 0.0
    %165 = vmatpush1.xpose.msra.mxu0 0.0
    %166 = vmatprep.subr.mxu0 0.0
    %167 = vmatpush1.xpose.msra.mxu0 0.0
    %168 = vmatprep.subr.mxu0 0.0
    %169 = vmatpush1.xpose.msra.mxu0 0.0
    %170 = vmatprep.subr.mxu0 0.0
    %171 = vmatpush1.xpose.msra.mxu0 0.0
    %172 = vmatprep.subr.mxu0 0.0
    %173 = vmatpush1.xpose.msra.mxu0 0.0
    %174 = vmatprep.subr.mxu0 0.0
    %175 = vmatpush1.xpose.msra.mxu0 0.0
    %176 = vmatprep.subr.mxu0 0.0
    %177 = vmatpush1.xpose.msra.mxu0 0.0
    %178 = vmatprep.subr.mxu0 0.0
    %179 = vmatpush1.xpose.msra.mxu0 0.0
    %180 = vmatprep.subr.mxu0 0.0
    %181 = vmatpush1.xpose.msra.mxu0 0.0
    %182 = vmatprep.subr.mxu0 0.0
    %183 = vmatpush1.xpose.msra.mxu0 0.0
    %184 = vmatprep.subr.mxu0 0.0
    %185 = vmatpush1.xpose.msra.mxu0 0.0
    %186 = vmatprep.subr.mxu0 0.0
    %187 = vmatpush1.xpose.msra.mxu0 0.0
    %188 = vmatprep.subr.mxu0 0.0
    %189 = vmatpush1.xpose.msra.mxu0 0.0
    %190 = vmatprep.mubr.f32.mxu0 0.0
    %191 = vmatmul.mubr.f32.gmra.mrb[0].mxu0 %v48
    %v192 = vpop.f32.mrb[0].mxu0
    %v193 = vadd.f32 0.0, %v192
    %v194 = vpop.f32.mrb[0].mxu0
    %195 = vdwg.mxu0
    %v196 = vmul.f32 %v193, 14.285714
    %197 = vmatprep.subr.mxu0 0.0
    %198 = vmatpush1.xpose.msra.mxu0 %v54
    %199 = vmatprep.subr.mxu0 0.0
    %200 = vmatpush1.xpose.msra.mxu0 0.0
    %201 = vmatprep.subr.mxu0 0.0
    %202 = vmatpush1.xpose.msra.mxu0 0.0
    %203 = vmatprep.subr.mxu0 0.0
    %204 = vmatpush1.xpose.msra.mxu0 0.0
    %205 = vmatprep.subr.mxu0 0.0
    %206 = vmatpush1.xpose.msra.mxu0 0.0
    %207 = vmatprep.subr.mxu0 0.0
    %208 = vmatpush1.xpose.msra.mxu0 0.0
    %209 = vmatprep.subr.mxu0 0.0
    %210 = vmatpush1.xpose.msra.mxu0 0.0
    %211 = vmatprep.subr.mxu0 0.0
    %212 = vmatpush1.xpose.msra.mxu0 0.0
    %213 = vmatprep.subr.mxu0 0.0
    %214 = vmatpush1.xpose.msra.mxu0 0.0
    %215 = vmatprep.subr.mxu0 0.0
    %216 = vmatpush1.xpose.msra.mxu0 0.0
    %217 = vmatprep.subr.mxu0 0.0
    %218 = vmatpush1.xpose.msra.mxu0 0.0
    %219 = vmatprep.subr.mxu0 0.0
    %220 = vmatpush1.xpose.msra.mxu0 0.0
    %221 = vmatprep.subr.mxu0 0.0
    %222 = vmatpush1.xpose.msra.mxu0 0.0
    %223 = vmatprep.subr.mxu0 0.0
    %224 = vmatpush1.xpose.msra.mxu0 0.0
    %225 = vmatprep.subr.mxu0 0.0
    %226 = vmatpush1.xpose.msra.mxu0 0.0
    %227 = vmatprep.subr.mxu0 0.0
    %228 = vmatpush1.xpose.msra.mxu0 0.0
    %229 = vmatprep.subr.mxu0 0.0
    %230 = vmatpush1.xpose.msra.mxu0 0.0
    %231 = vmatprep.subr.mxu0 0.0
    %232 = vmatpush1.xpose.msra.mxu0 0.0
    %233 = vmatprep.subr.mxu0 0.0
    %234 = vmatpush1.xpose.msra.mxu0 0.0
    %235 = vmatprep.subr.mxu0 0.0
    %236 = vmatpush1.xpose.msra.mxu0 0.0
    %237 = vmatprep.subr.mxu0 0.0
    %238 = vmatpush1.xpose.msra.mxu0 0.0
    %239 = vmatprep.subr.mxu0 0.0
    %240 = vmatpush1.xpose.msra.mxu0 0.0
    %241 = vmatprep.subr.mxu0 0.0
    %242 = vmatpush1.xpose.msra.mxu0 0.0
    %243 = vmatprep.subr.mxu0 0.0
    %244 = vmatpush1.xpose.msra.mxu0 0.0
    %245 = vmatprep.subr.mxu0 0.0
    %246 = vmatpush1.xpose.msra.mxu0 0.0
    %247 = vmatprep.subr.mxu0 0.0
    %248 = vmatpush1.xpose.msra.mxu0 0.0
    %249 = vmatprep.subr.mxu0 0.0
    %250 = vmatpush1.xpose.msra.mxu0 0.0
    %251 = vmatprep.subr.mxu0 0.0
    %252 = vmatpush1.xpose.msra.mxu0 0.0
    %253 = vmatprep.subr.mxu0 0.0
    %254 = vmatpush1.xpose.msra.mxu0 0.0
    %255 = vmatprep.subr.mxu0 0.0
    %256 = vmatpush1.xpose.msra.mxu0 0.0
    %257 = vmatprep.subr.mxu0 0.0
    %258 = vmatpush1.xpose.msra.mxu0 0.0
    %259 = vmatprep.subr.mxu0 0.0
    %260 = vmatpush1.xpose.msra.mxu0 0.0
    %261 = vmatprep.mubr.f32.mxu0 0.0
    %262 = vmatmul.mubr.f32.gmra.mrb[0].mxu0 %v54
    %v263 = vpop.f32.mrb[0].mxu0
    %v264 = vadd.f32 0.0, %v263
    %v265 = vpop.f32.mrb[0].mxu0
    %266 = vdwg.mxu0
    %v267 = vmul.f32 %v264, 14.285714
    %v268 = vsub.f32 %v125, 14.285714
    %v269 = vmul.f32 %v268, 1.442695
    %v270 = vpow.pop %v269
    %v271 = vsub.f32 %v196, 14.285714
    %v272 = vmul.f32 %v271, 1.442695
    %v273 = vpow.pop %v272
    %v274 = vsub.f32 %v267, 14.285714
    %v275 = vmul.f32 %v274, 1.442695
    %v276 = vpow.pop %v275
    %v277 = vlaneseq
    %v278 = vshrl.u32 %v277, 7
    %v279 = vlaneseq
    %v280 = vand.u32 %v279, 127
    %vm281 = vcmp.ne.s32.totalorder %v278, %v280
    %v282 = vsel %vm281, %v270, 0.0
    %v283 = vsel %vm281, %v276, 0.0
    %vm284 = vcmask 64512
    %v285 = vsel %vm284, %v282, 0.0
    %286 = vadd.xlane.f32.xlu0 %v285
    %v287 = vpop.xlane.xlu0 %286
    %v288 = vsel %vm284, %v273, 0.0
    %289 = vadd.xlane.f32.xlu0 %v288
    %v290 = vpop.xlane.xlu0 %289
    %v291 = vadd.f32 %v287, %v290
    %v292 = vrot.slane %v288, 4
    %v293 = vadd.f32 %v288, %v292
    %v294 = vrot.slane %v293, 2
    %v295 = vadd.f32 %v293, %v294
    %v296 = vrot.slane %v295, 1
    %v297 = vadd.f32 %v295, %v296
    %v298 = vsel %vm284, %v283, 0.0
    %v299 = vrot.slane %v298, 4
    %v300 = vadd.f32 %v298, %v299
    %v301 = vrot.slane %v300, 2
    %v302 = vadd.f32 %v300, %v301
    %v303 = vrot.slane %v302, 1
    %v304 = vadd.f32 %v302, %v303
    %v305 = vadd.f32 %v297, %v304
    %v306 = vmul.f32 %v48, %v54
    %307 = vadd.xlane.f32.xlu0 %v306
    %v308 = vpop.xlane.xlu0 %307
    %v309 = vmul.f32 %v308, 14.285714
    %vm310 = vcmask 7168
    %v311 = vsel %vm310, %v309, 0.0
    %312 = vadd.xlane.f32.xlu0 %v311
    %v313 = vpop.xlane.xlu0 %312
    %v314 = vrot.slane %v313, 4
    %v315 = vadd.f32 %v313, %v314
    %v316 = vrot.slane %v315, 2
    %v317 = vadd.f32 %v315, %v316
    %v318 = vrot.slane %v317, 1
    %v319 = vadd.f32 %v317, %v318
    %s320 = vtos %v319
    %s321 = smul.f32 %s320, 2.0
    %s322 = ssub.f32 %s321, 228.57143
    %v323 = vlog2.pop %v291
    %v324 = vmul.f32 %v323, 0.6931472
    %v325 = vsel %vm310, %v324, 0.0
    %326 = vadd.xlane.f32.xlu0 %v325
    %v327 = vpop.xlane.xlu0 %326
    %v328 = vrot.slane %v327, 4
    %v329 = vadd.f32 %v327, %v328
    %v330 = vrot.slane %v329, 2
    %v331 = vadd.f32 %v329, %v330
    %v332 = vrot.slane %v331, 1
    %v333 = vadd.f32 %v331, %v332
    %s334 = vtos %v333
    %s335 = ssub.f32 %s322, %s334
    %v336 = vlog2.pop %v305
    %v337 = vmul.f32 %v336, 0.6931472
    %vm338 = vcmask 57344
    %v339 = vsel %vm338, %v337, 0.0
    %340 = vadd.xlane.f32.xlu0 %v339
    %v341 = vpop.xlane.xlu0 %340
    %v342 = vrot.slane %v341, 4
    %v343 = vadd.f32 %v341, %v342
    %v344 = vrot.slane %v343, 2
    %v345 = vadd.f32 %v343, %v344
    %v346 = vrot.slane %v345, 1
    %v347 = vadd.f32 %v345, %v346
    %s348 = vtos %v347
    %s349 = ssub.f32 %s335, %s348
    %s350 = smul.f32 %s349, -1.0
    %v351 = vrcp.pop 16.0
    %s352 = vtos %v351
    %s353 = smul.f32 %s350, %s352
    %v354 = vld [vmem:[%s1] sm:$0xff]
    %355 = vset.pattern.permute.xlu0 0
    %356 = vperm.xlu0 %355, %v354
    %v357 = vpop.permute.xlu0 %356
    %vm358 = vcmp.eq.s32.totalorder %v280, %v357
    %v359 = vsel %vm358, 1.0, 0.0
    %360 = vset.pattern.permute.xlu0 1
    %361 = vperm.xlu0 %360, %v354
    %v362 = vpop.permute.xlu0 %361
    %vm363 = vcmp.eq.s32.totalorder %v280, %v362
    %v364 = vsel %vm363, 1.0, 0.0
    %v365 = vld [vmem:[%s2] sm:$0x1]
    %v366 = vlaneseq
    %v367 = vshrl.u32 %v366, 7
    %v368 = vsub.s32 0, %v367
    %v369 = vrot.slane %v365, %v368
    %v370 = vmul.f32 %v359, %v369
    %371 = vadd.xlane.f32.xlu0 %v370
    %v372 = vpop.xlane.xlu0 %371
    %v373 = vld [vmem:[%s2 + $0x1] sm:$0x1]
    %v374 = vlaneseq
    %v375 = vshrl.u32 %v374, 7
    %v376 = vsub.s32 0, %v375
    %v377 = vrot.slane %v373, %v376
    %v378 = vmul.f32 %v364, %v377
    %379 = vadd.xlane.f32.xlu0 %v378
    %v380 = vpop.xlane.xlu0 %379
    %v381 = vld [vmem:[%s5] sm:$0xff]
    %vm382 = vcmask 39936
    %v383 = vsel %vm382, %v381, -inf
    %384 = vmax.xlane.f32.xlu0 %v383
    %v385 = vpop.xlane.xlu0 %384
    %v386 = vsub.f32 %v381, %v385
    %v387 = vmul.f32 %v386, 1.442695
    %v388 = vpow.pop %v387
    %v389 = vsel %vm382, %v388, 0.0
    %390 = vadd.xlane.f32.xlu0 %v389
    %v391 = vpop.xlane.xlu0 %390
    %v392 = vlog2.pop %v391
    %v393 = vmul.f32 %v392, 0.6931472
    %v394 = vadd.f32 %v385, %v393
    %v395 = vmul.f32 %v381, %v359
    %v396 = vsel %vm382, %v395, 0.0
    %397 = vadd.xlane.f32.xlu0 %v396
    %v398 = vpop.xlane.xlu0 %397
    %v399 = vsub.f32 %v394, %v398
    %v400 = vadd.f32 %v399, 0.0
    %s401 = scalar_lea.vmem %s5, 8
    %v402 = vld [vmem:[%s401] sm:$0xff]
    %v403 = vsel %vm382, %v402, -inf
    %404 = vmax.xlane.f32.xlu0 %v403
    %v405 = vpop.xlane.xlu0 %404
    %v406 = vsub.f32 %v402, %v405
    %v407 = vmul.f32 %v406, 1.442695
    %v408 = vpow.pop %v407
    %v409 = vsel %vm382, %v408, 0.0
    %410 = vadd.xlane.f32.xlu0 %v409
    %v411 = vpop.xlane.xlu0 %410
    %v412 = vlog2.pop %v411
    %v413 = vmul.f32 %v412, 0.6931472
    %v414 = vadd.f32 %v405, %v413
    %v415 = vmul.f32 %v402, %v359
    %v416 = vsel %vm382, %v415, 0.0
    %417 = vadd.xlane.f32.xlu0 %v416
    %v418 = vpop.xlane.xlu0 %417
    %v419 = vsub.f32 %v414, %v418
    %v420 = vadd.f32 %v400, %v419
    %v421 = vmul.f32 %v420, %v372
    %v422 = vmul.f32 %v421, %v380
    %v423 = vsel %vm310, %v422, 0.0
    %424 = vadd.xlane.f32.xlu0 %v423
    %v425 = vpop.xlane.xlu0 %424
    %v426 = vrot.slane %v425, 4
    %v427 = vadd.f32 %v425, %v426
    %v428 = vrot.slane %v427, 2
    %v429 = vadd.f32 %v427, %v428
    %v430 = vrot.slane %v429, 1
    %v431 = vadd.f32 %v429, %v430
    %s432 = vtos %v431
    %v433 = vrcp.pop 8.0
    %s434 = vtos %v433
    %s435 = smul.f32 %s432, %s434
    %v436 = vsel %vm310, %v380, 0.0
    %437 = vadd.xlane.f32.xlu0 %v436
    %v438 = vpop.xlane.xlu0 %437
    %v439 = vrot.slane %v438, 4
    %v440 = vadd.f32 %v438, %v439
    %v441 = vrot.slane %v440, 2
    %v442 = vadd.f32 %v440, %v441
    %v443 = vrot.slane %v442, 1
    %v444 = vadd.f32 %v442, %v443
    %s445 = vtos %v444
    %v446 = vrcp.pop 8.0
    %s447 = vtos %v446
    %s448 = smul.f32 %s445, %s447
    %v449 = vsel %vm310, %v372, 0.0
    %450 = vadd.xlane.f32.xlu0 %v449
    %v451 = vpop.xlane.xlu0 %450
    %v452 = vrot.slane %v451, 4
    %v453 = vadd.f32 %v451, %v452
    %v454 = vrot.slane %v453, 2
    %v455 = vadd.f32 %v453, %v454
    %v456 = vrot.slane %v455, 1
    %v457 = vadd.f32 %v455, %v456
    %s458 = vtos %v457
    %v459 = vrcp.pop 8.0
    %s460 = vtos %v459
    %s461 = smul.f32 %s458, %s460
    %s462 = smul.f32 %s448, %s461
    %v463 = vstv %s462
    %v464 = vrcp.pop %v463
    %s465 = vtos %v464
    %s466 = smul.f32 %s435, %s465
    %s467 = sld [smem:[#allocation2]]
    %s468 = sld [smem:[#allocation2 + $0x1]]
    %s469 = ssub.f32 1.0, %s467
    %s470 = smul.f32 %s469, %s466
    %s471 = smul.f32 %s467, %s353
    %v472 = vstv %s468
    %v473 = vrcp.pop %v472
    %s474 = vtos %v473
    %s475 = smul.f32 %s471, %s474
    %s476 = sadd.f32 %s470, %s475
    %s477 = scalar_lea.smem [#allocation5], 0
    %478 = sst [smem:[%s477]] %s476
    %s479 = scalar_lea.smem [#allocation6], 0
    %480 = sst [smem:[%s479]] %s466
    %s481 = scalar_lea.smem [#allocation8], 0
    %482 = sst [smem:[%s481]] %s353
    // Predicated region
    $region30: #{dah_loss_forward.1} parent=1 // pred_check
      _
    $region31: #{dah_loss_forward.1} parent=1 // pred_check_branch
      %484 = sbr.rel (0) target = $region33
    $region32: #{dah_loss_forward.1} parent=1 // pred_region
      %s486 = ssub.s32 16, 16
      %487 = vsyncadd [#allocation3], %s486
      %490 = dma.smem_to_hbm [#allocation5], 16, %s6, [#allocation3]
    $region33: #{dah_loss_forward.1} parent=1 // pred_fallthru
      _
    // Predicated region
    $region34: #{dah_loss_forward.1} parent=1 // pred_check
      _
    $region35: #{dah_loss_forward.1} parent=1 // pred_check_branch
      %492 = sbr.rel (0) target = $region37
    $region36: #{dah_loss_forward.1} parent=1 // pred_region
      %s494 = ssub.s32 16, 16
      %495 = vsyncadd [#allocation7], %s494
      %498 = dma.smem_to_hbm [#allocation6], 16, %s7, [#allocation7]
    $region37: #{dah_loss_forward.1} parent=1 // pred_fallthru
      _
    // Predicated region
    $region38: #{dah_loss_forward.1} parent=1 // pred_check
      _
    $region39: #{dah_loss_forward.1} parent=1 // pred_check_branch
      %500 = sbr.rel (0) target = $region41
    $region40: #{dah_loss_forward.1} parent=1 // pred_region
      %s502 = ssub.s32 16, 16
      %503 = vsyncadd [#allocation7], %s502
      %506 = dma.smem_to_hbm [#allocation8], 16, %s8, [#allocation7]
    $region41: #{dah_loss_forward.1} parent=1 // pred_fallthru
      _
    // Predicated region
    $region42: #{dah_loss_forward.1} parent=1 // pred_check
      _
    $region43: #{dah_loss_forward.1} parent=1 // pred_check_branch
      %508 = sbr.rel (0) target = $region45
    $region44: #{dah_loss_forward.1} parent=1 // pred_region
      %509 = dma.done [#allocation3], 16
    $region45: #{dah_loss_forward.1} parent=1 // pred_fallthru
      _
    // Predicated region
    $region46: #{dah_loss_forward.1} parent=1 // pred_check
      _
    $region47: #{dah_loss_forward.1} parent=1 // pred_check_branch
      %511 = sbr.rel (0) target = $region49
    $region48: #{dah_loss_forward.1} parent=1 // pred_region
      %512 = dma.done [#allocation7], 16
    $region49: #{dah_loss_forward.1} parent=1 // pred_fallthru
      _
    // Predicated region
    $region50: #{dah_loss_forward.1} parent=1 // pred_check
      _
    $region51: #{dah_loss_forward.1} parent=1 // pred_check_branch
      %514 = sbr.rel (0) target = $region53
    $region52: #{dah_loss_forward.1} parent=1 // pred_region
      %515 = dma.done [#allocation7], 16
    $region53: #{dah_loss_forward.1} parent=1 // pred_fallthru
      _
    %516 = sfence
    %517 = vsyncpa [#allocation3], 1
    %518 = vsyncpa [#allocation7], 1
    %519 = vsyncpa [#allocation4], 1

</llo_original>
